<compile_context>
chip_gen: v7x
topology: tpu7x:2x2x1
jax: 0.10.0
libtpu: 0.0.40
codegen_flags: <defaults>
</compile_context>

<pallas_src>
import functools

import jax
import jax.numpy as jnp
from jax.experimental import pallas as pl
from jax.experimental.pallas import tpu as pltpu

EPS = 1e-5
LANE = 128
SUBLANE = 8


# ---------------------------------------------------------------------------
# Kernel
# ---------------------------------------------------------------------------
def _forward_one_net(x_ref, w_ref, v_ref, n_blocks, p):
    """Unrolled (trace-time) DNN forward: [BN -> affine -> (ReLU) -> Linear]*.

    x_ref: (n, p)            lane-padded activations
    w_ref: (n_blocks * p, p) concatenated zero-padded Linear weights
    v_ref: (rows, p)         rows 3i / 3i+1 / 3i+2 = gamma_i / beta_i / bias_i
                             (gamma=1, beta=0 rows for the affine=False block,
                              which is numerically the identity affine)
    """
    h = x_ref[...].astype(jnp.float32)
    n = h.shape[0]
    inv_n = jnp.float32(1.0 / n)
    for i in range(n_blocks):
        # --- BatchNorm1d: batch stats, biased variance, two-pass (stable) ---
        mean = jnp.sum(h, axis=0, keepdims=True) * inv_n
        d = h - mean
        var = jnp.sum(d * d, axis=0, keepdims=True) * inv_n   # >= 0 always
        h = d * jax.lax.rsqrt(var + EPS)
        # --- affine (identity rows for the non-affine last block) ---
        gamma = v_ref[3 * i:3 * i + 1, :]
        beta = v_ref[3 * i + 1:3 * i + 2, :]
        h = h * gamma + beta
        # --- ReLU on all but the last block ---
        if i < n_blocks - 1:
            h = jnp.maximum(h, 0.0)
        # --- Linear ---
        w = w_ref[i * p:(i + 1) * p, :]
        bias = v_ref[3 * i + 2:3 * i + 3, :]
        h = jnp.dot(h, w, preferred_element_type=jnp.float32) + bias
    return h


def _dcca_kernel(x1_ref, w1_ref, v1_ref, x2_ref, w2_ref, v2_ref,
                 o1_ref, o2_ref, *, nb1, nb2, p1, p2):
    o1_ref[...] = _forward_one_net(x1_ref, w1_ref, v1_ref, nb1, p1).astype(o1_ref.dtype)
    o2_ref[...] = _forward_one_net(x2_ref, w2_ref, v2_ref, nb2, p2).astype(o2_ref.dtype)


# ---------------------------------------------------------------------------
# Wrapper
# ---------------------------------------------------------------------------
def _round_up(x, m):
    return pl.cdiv(x, m) * m


def _pack_net(params):
    """Pack one net's params into lane-dense slabs (wslab, vslab) + pad width P."""
    n_blocks = len(params)
    widths = [params[0]["w"].shape[0]] + [p["w"].shape[1] for p in params]
    p_pad = max(LANE, max(_round_up(w, LANE) for w in widths))

    w_parts, v_rows = [], []
    for blk in params:
        f_in, f_out = blk["w"].shape
        w_pad = jnp.zeros((p_pad, p_pad), jnp.float32)
        w_pad = w_pad.at[:f_in, :f_out].set(blk["w"].astype(jnp.float32))
        w_parts.append(w_pad)

        gamma = blk.get("gamma", jnp.ones((f_in,), jnp.float32))
        beta = blk.get("beta", jnp.zeros((f_in,), jnp.float32))
        bias = blk["b"]
        v_rows.append(jnp.zeros((p_pad,), jnp.float32).at[:f_in].set(gamma))
        v_rows.append(jnp.zeros((p_pad,), jnp.float32).at[:f_in].set(beta))
        v_rows.append(jnp.zeros((p_pad,), jnp.float32).at[:f_out].set(bias))

    wslab = jnp.concatenate(w_parts, axis=0)          # (n_blocks*P, P)
    vslab = jnp.stack(v_rows, axis=0)                 # (3*n_blocks, P)
    rows = vslab.shape[0]
    rows_pad = _round_up(rows, SUBLANE)
    if rows_pad != rows:
        vslab = jnp.pad(vslab, ((0, rows_pad - rows), (0, 0)))
    return wslab, vslab, p_pad


def _dcca_forward_impl(nn1_params, nn2_params, x1, x2):
    n = x1.shape[0]
    assert x2.shape[0] == n
    f1_out = nn1_params[-1]["w"].shape[1]
    f2_out = nn2_params[-1]["w"].shape[1]

    w1, v1, p1 = _pack_net(nn1_params)
    w2, v2, p2 = _pack_net(nn2_params)
    x1p = jnp.pad(x1.astype(jnp.float32), ((0, 0), (0, p1 - x1.shape[1])))
    x2p = jnp.pad(x2.astype(jnp.float32), ((0, 0), (0, p2 - x2.shape[1])))

    args = (x1p, w1, v1, x2p, w2, v2)

    # Everything (inputs + outputs + one live activation) must fit in VMEM
    # for this single-block design; fine for toy/small shapes.
    total_bytes = sum(a.size * a.dtype.itemsize for a in args) + 4 * n * (p1 + p2)
    assert total_bytes < 16 * 1024 * 1024, (
        "single-block DCCA kernel exceeds conservative VMEM budget; "
        "use the batch-tiled variant (see TODO) for large batches")

    kernel = functools.partial(
        _dcca_kernel, nb1=len(nn1_params), nb2=len(nn2_params), p1=p1, p2=p2)

    out1, out2 = pl.pallas_call(
        kernel,
        out_shape=(jax.ShapeDtypeStruct((n, p1), x1.dtype),
                   jax.ShapeDtypeStruct((n, p2), x2.dtype)),
        grid=(1,),  # single step: both nets fused, no per-step overhead x2
        in_specs=[pl.BlockSpec(a.shape, lambda i: (0, 0)) for a in args],
        out_specs=(pl.BlockSpec((n, p1), lambda i: (0, 0)),
                   pl.BlockSpec((n, p2), lambda i: (0, 0))),
        compiler_params=pltpu.CompilerParams(
            dimension_semantics=("arbitrary",)),
    )(*args)

    return out1[:, :f1_out], out2[:, :f2_out]


dcca_forward = jax.jit(_dcca_forward_impl)


# ---------------------------------------------------------------------------
# Params / pure-JAX reference
# ---------------------------------------------------------------------------
def init_dnn_params(key, layers):
    """Params mirroring the PyTorch DNN __init__ shapes (W stored (Fin, Fout))."""
    params = []
    n_blocks = len(layers) - 1
    for i in range(n_blocks):
        f_in, f_out = layers[i], layers[i + 1]
        key, kw, kb = jax.random.split(key, 3)
        bound = 1.0 / jnp.sqrt(jnp.float32(f_in))
        p = dict(
            w=jax.random.uniform(kw, (f_in, f_out), jnp.float32, -bound, bound),
            b=jax.random.uniform(kb, (f_out,), jnp.float32, -bound, bound),
        )
        if i != n_blocks - 1:               # BatchNorm affine only for non-last
            p["gamma"] = jnp.ones((f_in,), jnp.float32)
            p["beta"] = jnp.zeros((f_in,), jnp.float32)
        params.append(p)
    return params


def _dnn_reference(params, x):
    """Pure-JAX reference (training-mode batch stats, biased var, two-pass)."""
    n_blocks = len(params)
    h = x
    for i, p in enumerate(params):
        mean = jnp.mean(h, axis=0, keepdims=True)
        var = jnp.mean((h - mean) ** 2, axis=0, keepdims=True)
        h = (h - mean) / jnp.sqrt(var + EPS)
        if "gamma" in p:
            h = h * p["gamma"] + p["beta"]
        if i < n_blocks - 1:
            h = jnp.maximum(h, 0.0)
        h = h @ p["w"] + p["b"]
    return h


# ---------------------------------------------------------------------------
if __name__ == "__main__":
    # mode='l-bfgs' -> float32 networks
    nn1_layers = [16, 32, 8]
    nn2_layers = [20, 32, 8]
    batch = 8

    key = jax.random.PRNGKey(0)
    k1, k2, kx1, kx2 = jax.random.split(key, 4)
    nn1_params = init_dnn_params(k1, nn1_layers)
    nn2_params = init_dnn_params(k2, nn2_layers)

    x1 = jax.random.normal(kx1, (batch, nn1_layers[0]), jnp.float32)
    x2 = jax.random.normal(kx2, (batch, nn2_layers[0]), jnp.float32)

    out1, out2 = dcca_forward(nn1_params, nn2_params, x1, x2)
    jax.block_until_ready((out1, out2))

    assert out1.shape == (batch, nn1_layers[-1])
    assert out2.shape == (batch, nn2_layers[-1])

    # Sanity-check against the pure-JAX reference (MXU f32 path tolerance).
    ref1 = _dnn_reference(nn1_params, x1)
    ref2 = _dnn_reference(nn2_params, x2)
    assert bool(jnp.allclose(out1, ref1, atol=2e-3, rtol=2e-3))
    assert bool(jnp.allclose(out2, ref2, atol=2e-3, rtol=2e-3))

    print("KERNEL_OK")
</pallas_src>

<mosaic_0001>
module attributes {stable_mosaic.version = 11 : i64} {
  func.func @_dcca_kernel(%arg0: i32, %arg1: memref<8x128xf32, #tpu.memory_space<vmem>>, %arg2: memref<256x128xf32, #tpu.memory_space<vmem>>, %arg3: memref<8x128xf32, #tpu.memory_space<vmem>>, %arg4: memref<8x128xf32, #tpu.memory_space<vmem>>, %arg5: memref<256x128xf32, #tpu.memory_space<vmem>>, %arg6: memref<8x128xf32, #tpu.memory_space<vmem>>, %arg7: memref<8x128xf32, #tpu.memory_space<vmem>>, %arg8: memref<8x128xf32, #tpu.memory_space<vmem>>) attributes {dimension_semantics = [#tpu.dimension_semantics<arbitrary>], iteration_bounds = array<i64: 1>, scalar_prefetch = 0 : i64, scratch_operands = 0 : i64, tpu.core_type = #tpu.core_type<tc>, window_params = [{pipeline_mode = #tpu.pipeline_mode<synchronous>, transform_indices = @transform_0, window_bounds = array<i64: 8, 128>}, {pipeline_mode = #tpu.pipeline_mode<synchronous>, transform_indices = @transform_1, window_bounds = array<i64: 256, 128>}, {pipeline_mode = #tpu.pipeline_mode<synchronous>, transform_indices = @transform_2, window_bounds = array<i64: 8, 128>}, {pipeline_mode = #tpu.pipeline_mode<synchronous>, transform_indices = @transform_3, window_bounds = array<i64: 8, 128>}, {pipeline_mode = #tpu.pipeline_mode<synchronous>, transform_indices = @transform_4, window_bounds = array<i64: 256, 128>}, {pipeline_mode = #tpu.pipeline_mode<synchronous>, transform_indices = @transform_5, window_bounds = array<i64: 8, 128>}, {pipeline_mode = #tpu.pipeline_mode<synchronous>, transform_indices = @transform_6, window_bounds = array<i64: 8, 128>}, {pipeline_mode = #tpu.pipeline_mode<synchronous>, transform_indices = @transform_7, window_bounds = array<i64: 8, 128>}]} {
    %c0 = arith.constant 0 : index
    %c0_0 = arith.constant 0 : index
    %0 = vector.load %arg1[%c0, %c0_0] : memref<8x128xf32, #tpu.memory_space<vmem>>, vector<8x128xf32>
    %cst = arith.constant dense<0.000000e+00> : vector<128xf32>
    %1 = vector.multi_reduction <add>, %0, %cst [0] : vector<8x128xf32> to vector<128xf32>
    %2 = vector.shape_cast %1 : vector<128xf32> to vector<1x128xf32>
    %cst_1 = arith.constant 1.250000e-01 : f32
    %3 = vector.broadcast %cst_1 : f32 to vector<1x128xf32>
    %4 = arith.mulf %2, %3 : vector<1x128xf32>
    %5 = vector.broadcast %4 : vector<1x128xf32> to vector<8x128xf32>
    %6 = arith.subf %0, %5 : vector<8x128xf32>
    %7 = arith.mulf %6, %6 : vector<8x128xf32>
    %cst_2 = arith.constant dense<0.000000e+00> : vector<128xf32>
    %8 = vector.multi_reduction <add>, %7, %cst_2 [0] : vector<8x128xf32> to vector<128xf32>
    %9 = vector.shape_cast %8 : vector<128xf32> to vector<1x128xf32>
    %cst_3 = arith.constant 1.250000e-01 : f32
    %10 = vector.broadcast %cst_3 : f32 to vector<1x128xf32>
    %11 = arith.mulf %9, %10 : vector<1x128xf32>
    %cst_4 = arith.constant 9.99999974E-6 : f32
    %12 = vector.broadcast %cst_4 : f32 to vector<1x128xf32>
    %13 = arith.addf %11, %12 : vector<1x128xf32>
    %14 = math.rsqrt %13 : vector<1x128xf32>
    %15 = vector.broadcast %14 : vector<1x128xf32> to vector<8x128xf32>
    %16 = arith.mulf %6, %15 : vector<8x128xf32>
    %c0_5 = arith.constant 0 : index
    %c0_6 = arith.constant 0 : index
    %17 = vector.load %arg3[%c0_5, %c0_6] : memref<8x128xf32, #tpu.memory_space<vmem>>, vector<1x128xf32>
    %c1 = arith.constant 1 : index
    %c0_7 = arith.constant 0 : index
    %18 = vector.load %arg3[%c1, %c0_7] : memref<8x128xf32, #tpu.memory_space<vmem>>, vector<1x128xf32>
    %19 = vector.broadcast %17 : vector<1x128xf32> to vector<8x128xf32>
    %20 = arith.mulf %16, %19 : vector<8x128xf32>
    %21 = vector.broadcast %18 : vector<1x128xf32> to vector<8x128xf32>
    %22 = arith.addf %20, %21 : vector<8x128xf32>
    %cst_8 = arith.constant 0.000000e+00 : f32
    %23 = vector.broadcast %cst_8 : f32 to vector<8x128xf32>
    %24 = arith.maximumf %22, %23 : vector<8x128xf32>
    %c0_9 = arith.constant 0 : index
    %c0_10 = arith.constant 0 : index
    %25 = vector.load %arg2[%c0_9, %c0_10] : memref<256x128xf32, #tpu.memory_space<vmem>>, vector<128x128xf32>
    %c2 = arith.constant 2 : index
    %c0_11 = arith.constant 0 : index
    %26 = vector.load %arg3[%c2, %c0_11] : memref<8x128xf32, #tpu.memory_space<vmem>>, vector<1x128xf32>
    %cst_12 = arith.constant dense<0.000000e+00> : vector<8x128xf32>
    %27 = tpu.matmul %24, %25, %cst_12 {dimension_numbers = #tpu.dot_dimension_numbers<[1], [0], [0], [1], [0, 0, 1, 1], [], []>} : vector<8x128xf32>, vector<128x128xf32>, vector<8x128xf32> -> vector<8x128xf32>
    %28 = vector.broadcast %26 : vector<1x128xf32> to vector<8x128xf32>
    %29 = arith.addf %27, %28 : vector<8x128xf32>
    %cst_13 = arith.constant dense<0.000000e+00> : vector<128xf32>
    %30 = vector.multi_reduction <add>, %29, %cst_13 [0] : vector<8x128xf32> to vector<128xf32>
    %31 = vector.shape_cast %30 : vector<128xf32> to vector<1x128xf32>
    %cst_14 = arith.constant 1.250000e-01 : f32
    %32 = vector.broadcast %cst_14 : f32 to vector<1x128xf32>
    %33 = arith.mulf %31, %32 : vector<1x128xf32>
    %34 = vector.broadcast %33 : vector<1x128xf32> to vector<8x128xf32>
    %35 = arith.subf %29, %34 : vector<8x128xf32>
    %36 = arith.mulf %35, %35 : vector<8x128xf32>
    %cst_15 = arith.constant dense<0.000000e+00> : vector<128xf32>
    %37 = vector.multi_reduction <add>, %36, %cst_15 [0] : vector<8x128xf32> to vector<128xf32>
    %38 = vector.shape_cast %37 : vector<128xf32> to vector<1x128xf32>
    %cst_16 = arith.constant 1.250000e-01 : f32
    %39 = vector.broadcast %cst_16 : f32 to vector<1x128xf32>
    %40 = arith.mulf %38, %39 : vector<1x128xf32>
    %cst_17 = arith.constant 9.99999974E-6 : f32
    %41 = vector.broadcast %cst_17 : f32 to vector<1x128xf32>
    %42 = arith.addf %40, %41 : vector<1x128xf32>
    %43 = math.rsqrt %42 : vector<1x128xf32>
    %44 = vector.broadcast %43 : vector<1x128xf32> to vector<8x128xf32>
    %45 = arith.mulf %35, %44 : vector<8x128xf32>
    %c3 = arith.constant 3 : index
    %c0_18 = arith.constant 0 : index
    %46 = vector.load %arg3[%c3, %c0_18] : memref<8x128xf32, #tpu.memory_space<vmem>>, vector<1x128xf32>
    %c4 = arith.constant 4 : index
    %c0_19 = arith.constant 0 : index
    %47 = vector.load %arg3[%c4, %c0_19] : memref<8x128xf32, #tpu.memory_space<vmem>>, vector<1x128xf32>
    %48 = vector.broadcast %46 : vector<1x128xf32> to vector<8x128xf32>
    %49 = arith.mulf %45, %48 : vector<8x128xf32>
    %50 = vector.broadcast %47 : vector<1x128xf32> to vector<8x128xf32>
    %51 = arith.addf %49, %50 : vector<8x128xf32>
    %c128 = arith.constant 128 : index
    %c0_20 = arith.constant 0 : index
    %52 = vector.load %arg2[%c128, %c0_20] : memref<256x128xf32, #tpu.memory_space<vmem>>, vector<128x128xf32>
    %c5 = arith.constant 5 : index
    %c0_21 = arith.constant 0 : index
    %53 = vector.load %arg3[%c5, %c0_21] : memref<8x128xf32, #tpu.memory_space<vmem>>, vector<1x128xf32>
    %cst_22 = arith.constant dense<0.000000e+00> : vector<8x128xf32>
    %54 = tpu.matmul %51, %52, %cst_22 {dimension_numbers = #tpu.dot_dimension_numbers<[1], [0], [0], [1], [0, 0, 1, 1], [], []>} : vector<8x128xf32>, vector<128x128xf32>, vector<8x128xf32> -> vector<8x128xf32>
    %55 = vector.broadcast %53 : vector<1x128xf32> to vector<8x128xf32>
    %56 = arith.addf %54, %55 : vector<8x128xf32>
    %c0_23 = arith.constant 0 : index
    %c0_24 = arith.constant 0 : index
    %57 = vector.load %arg7[%c0_23, %c0_24] : memref<8x128xf32, #tpu.memory_space<vmem>>, vector<8x128xf32>
    tpu.vector_store %arg7[%c0_23, %c0_24], %56 {strides = array<i32>} : memref<8x128xf32, #tpu.memory_space<vmem>>, vector<8x128xf32>,
    %c0_25 = arith.constant 0 : index
    %c0_26 = arith.constant 0 : index
    %58 = vector.load %arg4[%c0_25, %c0_26] : memref<8x128xf32, #tpu.memory_space<vmem>>, vector<8x128xf32>
    %cst_27 = arith.constant dense<0.000000e+00> : vector<128xf32>
    %59 = vector.multi_reduction <add>, %58, %cst_27 [0] : vector<8x128xf32> to vector<128xf32>
    %60 = vector.shape_cast %59 : vector<128xf32> to vector<1x128xf32>
    %cst_28 = arith.constant 1.250000e-01 : f32
    %61 = vector.broadcast %cst_28 : f32 to vector<1x128xf32>
    %62 = arith.mulf %60, %61 : vector<1x128xf32>
    %63 = vector.broadcast %62 : vector<1x128xf32> to vector<8x128xf32>
    %64 = arith.subf %58, %63 : vector<8x128xf32>
    %65 = arith.mulf %64, %64 : vector<8x128xf32>
    %cst_29 = arith.constant dense<0.000000e+00> : vector<128xf32>
    %66 = vector.multi_reduction <add>, %65, %cst_29 [0] : vector<8x128xf32> to vector<128xf32>
    %67 = vector.shape_cast %66 : vector<128xf32> to vector<1x128xf32>
    %cst_30 = arith.constant 1.250000e-01 : f32
    %68 = vector.broadcast %cst_30 : f32 to vector<1x128xf32>
    %69 = arith.mulf %67, %68 : vector<1x128xf32>
    %cst_31 = arith.constant 9.99999974E-6 : f32
    %70 = vector.broadcast %cst_31 : f32 to vector<1x128xf32>
    %71 = arith.addf %69, %70 : vector<1x128xf32>
    %72 = math.rsqrt %71 : vector<1x128xf32>
    %73 = vector.broadcast %72 : vector<1x128xf32> to vector<8x128xf32>
    %74 = arith.mulf %64, %73 : vector<8x128xf32>
    %c0_32 = arith.constant 0 : index
    %c0_33 = arith.constant 0 : index
    %75 = vector.load %arg6[%c0_32, %c0_33] : memref<8x128xf32, #tpu.memory_space<vmem>>, vector<1x128xf32>
    %c1_34 = arith.constant 1 : index
    %c0_35 = arith.constant 0 : index
    %76 = vector.load %arg6[%c1_34, %c0_35] : memref<8x128xf32, #tpu.memory_space<vmem>>, vector<1x128xf32>
    %77 = vector.broadcast %75 : vector<1x128xf32> to vector<8x128xf32>
    %78 = arith.mulf %74, %77 : vector<8x128xf32>
    %79 = vector.broadcast %76 : vector<1x128xf32> to vector<8x128xf32>
    %80 = arith.addf %78, %79 : vector<8x128xf32>
    %cst_36 = arith.constant 0.000000e+00 : f32
    %81 = vector.broadcast %cst_36 : f32 to vector<8x128xf32>
    %82 = arith.maximumf %80, %81 : vector<8x128xf32>
    %c0_37 = arith.constant 0 : index
    %c0_38 = arith.constant 0 : index
    %83 = vector.load %arg5[%c0_37, %c0_38] : memref<256x128xf32, #tpu.memory_space<vmem>>, vector<128x128xf32>
    %c2_39 = arith.constant 2 : index
    %c0_40 = arith.constant 0 : index
    %84 = vector.load %arg6[%c2_39, %c0_40] : memref<8x128xf32, #tpu.memory_space<vmem>>, vector<1x128xf32>
    %cst_41 = arith.constant dense<0.000000e+00> : vector<8x128xf32>
    %85 = tpu.matmul %82, %83, %cst_41 {dimension_numbers = #tpu.dot_dimension_numbers<[1], [0], [0], [1], [0, 0, 1, 1], [], []>} : vector<8x128xf32>, vector<128x128xf32>, vector<8x128xf32> -> vector<8x128xf32>
    %86 = vector.broadcast %84 : vector<1x128xf32> to vector<8x128xf32>
    %87 = arith.addf %85, %86 : vector<8x128xf32>
    %cst_42 = arith.constant dense<0.000000e+00> : vector<128xf32>
    %88 = vector.multi_reduction <add>, %87, %cst_42 [0] : vector<8x128xf32> to vector<128xf32>
    %89 = vector.shape_cast %88 : vector<128xf32> to vector<1x128xf32>
    %cst_43 = arith.constant 1.250000e-01 : f32
    %90 = vector.broadcast %cst_43 : f32 to vector<1x128xf32>
    %91 = arith.mulf %89, %90 : vector<1x128xf32>
    %92 = vector.broadcast %91 : vector<1x128xf32> to vector<8x128xf32>
    %93 = arith.subf %87, %92 : vector<8x128xf32>
    %94 = arith.mulf %93, %93 : vector<8x128xf32>
    %cst_44 = arith.constant dense<0.000000e+00> : vector<128xf32>
    %95 = vector.multi_reduction <add>, %94, %cst_44 [0] : vector<8x128xf32> to vector<128xf32>
    %96 = vector.shape_cast %95 : vector<128xf32> to vector<1x128xf32>
    %cst_45 = arith.constant 1.250000e-01 : f32
    %97 = vector.broadcast %cst_45 : f32 to vector<1x128xf32>
    %98 = arith.mulf %96, %97 : vector<1x128xf32>
    %cst_46 = arith.constant 9.99999974E-6 : f32
    %99 = vector.broadcast %cst_46 : f32 to vector<1x128xf32>
    %100 = arith.addf %98, %99 : vector<1x128xf32>
    %101 = math.rsqrt %100 : vector<1x128xf32>
    %102 = vector.broadcast %101 : vector<1x128xf32> to vector<8x128xf32>
    %103 = arith.mulf %93, %102 : vector<8x128xf32>
    %c3_47 = arith.constant 3 : index
    %c0_48 = arith.constant 0 : index
    %104 = vector.load %arg6[%c3_47, %c0_48] : memref<8x128xf32, #tpu.memory_space<vmem>>, vector<1x128xf32>
    %c4_49 = arith.constant 4 : index
    %c0_50 = arith.constant 0 : index
    %105 = vector.load %arg6[%c4_49, %c0_50] : memref<8x128xf32, #tpu.memory_space<vmem>>, vector<1x128xf32>
    %106 = vector.broadcast %104 : vector<1x128xf32> to vector<8x128xf32>
    %107 = arith.mulf %103, %106 : vector<8x128xf32>
    %108 = vector.broadcast %105 : vector<1x128xf32> to vector<8x128xf32>
    %109 = arith.addf %107, %108 : vector<8x128xf32>
    %c128_51 = arith.constant 128 : index
    %c0_52 = arith.constant 0 : index
    %110 = vector.load %arg5[%c128_51, %c0_52] : memref<256x128xf32, #tpu.memory_space<vmem>>, vector<128x128xf32>
    %c5_53 = arith.constant 5 : index
    %c0_54 = arith.constant 0 : index
    %111 = vector.load %arg6[%c5_53, %c0_54] : memref<8x128xf32, #tpu.memory_space<vmem>>, vector<1x128xf32>
    %cst_55 = arith.constant dense<0.000000e+00> : vector<8x128xf32>
    %112 = tpu.matmul %109, %110, %cst_55 {dimension_numbers = #tpu.dot_dimension_numbers<[1], [0], [0], [1], [0, 0, 1, 1], [], []>} : vector<8x128xf32>, vector<128x128xf32>, vector<8x128xf32> -> vector<8x128xf32>
    %113 = vector.broadcast %111 : vector<1x128xf32> to vector<8x128xf32>
    %114 = arith.addf %112, %113 : vector<8x128xf32>
    %c0_56 = arith.constant 0 : index
    %c0_57 = arith.constant 0 : index
    %115 = vector.load %arg8[%c0_56, %c0_57] : memref<8x128xf32, #tpu.memory_space<vmem>>, vector<8x128xf32>
    tpu.vector_store %arg8[%c0_56, %c0_57], %114 {strides = array<i32>} : memref<8x128xf32, #tpu.memory_space<vmem>>, vector<8x128xf32>,
    return
  }
  func.func @transform_0(%arg0: i32) -> (i32, i32) {
    %c0_i32 = arith.constant 0 : i32
    %c0_i32_0 = arith.constant 0 : i32
    %c0_i32_1 = arith.constant 0 : i32
    return %c0_i32, %c0_i32_0 : i32, i32
  }
  func.func @transform_1(%arg0: i32) -> (i32, i32) {
    %c0_i32 = arith.constant 0 : i32
    %c0_i32_0 = arith.constant 0 : i32
    %c0_i32_1 = arith.constant 0 : i32
    return %c0_i32, %c0_i32_0 : i32, i32
  }
  func.func @transform_2(%arg0: i32) -> (i32, i32) {
    %c0_i32 = arith.constant 0 : i32
    %c0_i32_0 = arith.constant 0 : i32
    %c0_i32_1 = arith.constant 0 : i32
    return %c0_i32, %c0_i32_0 : i32, i32
  }
  func.func @transform_3(%arg0: i32) -> (i32, i32) {
    %c0_i32 = arith.constant 0 : i32
    %c0_i32_0 = arith.constant 0 : i32
    %c0_i32_1 = arith.constant 0 : i32
    return %c0_i32, %c0_i32_0 : i32, i32
  }
  func.func @transform_4(%arg0: i32) -> (i32, i32) {
    %c0_i32 = arith.constant 0 : i32
    %c0_i32_0 = arith.constant 0 : i32
    %c0_i32_1 = arith.constant 0 : i32
    return %c0_i32, %c0_i32_0 : i32, i32
  }
  func.func @transform_5(%arg0: i32) -> (i32, i32) {
    %c0_i32 = arith.constant 0 : i32
    %c0_i32_0 = arith.constant 0 : i32
    %c0_i32_1 = arith.constant 0 : i32
    return %c0_i32, %c0_i32_0 : i32, i32
  }
  func.func @transform_6(%arg0: i32) -> (i32, i32) {
    %c0_i32 = arith.constant 0 : i32
    %c0_i32_0 = arith.constant 0 : i32
    %c0_i32_1 = arith.constant 0 : i32
    return %c0_i32, %c0_i32_0 : i32, i32
  }
  func.func @transform_7(%arg0: i32) -> (i32, i32) {
    %c0_i32 = arith.constant 0 : i32
    %c0_i32_0 = arith.constant 0 : i32
    %c0_i32_1 = arith.constant 0 : i32
    return %c0_i32, %c0_i32_0 : i32, i32
  }
}

</mosaic_0001>

<llo_original>
// kernel: _dcca_forward_impl.1
$region0: #{_dcca_forward_impl.1}
  #allocation0 [shape = 'u32[]', space=smem, size = 0x4, offset = 0x4, fixed_abs, tag = 'smem constant byte address 0x4 - core index']
  #allocation1 [shape = 'u32[144,128]{1,0:T(1,128)}', space=vmem, size = 0x12000, scoped, tag = 'internal scratch']
  %s0 = inlined_call_operand.vmem [shape: f32[8,128], index: 0, kind: input, shape index: {}]
  %s1 = inlined_call_operand.vmem [shape: f32[256,128], index: 1, kind: input, shape index: {}]
  %s2 = inlined_call_operand.vmem [shape: f32[8,128], index: 2, kind: input, shape index: {}]
  %s3 = inlined_call_operand.vmem [shape: f32[8,128], index: 3, kind: input, shape index: {}]
  %s4 = inlined_call_operand.vmem [shape: f32[256,128], index: 4, kind: input, shape index: {}]
  %s5 = inlined_call_operand.vmem [shape: f32[8,128], index: 5, kind: input, shape index: {}]
  %s6 = inlined_call_operand.hbm [shape: f32[8,128], index: 6, kind: output, shape index: {0}]
  %s7 = inlined_call_operand.hbm [shape: f32[8,128], index: 7, kind: output, shape index: {1}]
  %8 = xla_tuple %s6, %s7
  %s9 = sld [smem:[#allocation0]]
  $region42: #{_dcca_forward_impl.1} parent=0
    _
  %s11 = ssub.s32 1, %s9
  %s12 = scalar_select 0, %s11, %s9
  $region1: #{_dcca_forward_impl.1} parent=0
    #allocation2 [shape = 'u8[4096]{0}', space=vmem, size = 0x1000, scoped, tag = 'output window, operand 0, single buffered']
    #allocation3 [shape = 's32[1]{0}', space=sflag, size = 0x4, scoped, tag = 'scoped memory for _dcca_forward_impl.1']
    #allocation4 [shape = 'u8[4096]{0}', space=vmem, size = 0x1000, scoped, tag = 'output window, operand 1, single buffered']
    #allocation5 [shape = 's32[1]{0}', space=sflag, size = 0x4, scoped, tag = 'scoped memory for _dcca_forward_impl.1']
    %13 = vsyncpa [#allocation3], 0
    %14 = vsyncpa [#allocation5], 0
    // Predicated region
    $region2: #{_dcca_forward_impl.1} parent=1 // pred_check
      _
    $region3: #{_dcca_forward_impl.1} parent=1 // pred_check_branch
      %16 = sbr.rel (0) target = $region5
    $region4: #{_dcca_forward_impl.1} parent=1 // pred_region
      _
    $region5: #{_dcca_forward_impl.1} parent=1 // pred_fallthru
      _
    // Predicated region
    $region6: #{_dcca_forward_impl.1} parent=1 // pred_check
      _
    $region7: #{_dcca_forward_impl.1} parent=1 // pred_check_branch
      %18 = sbr.rel (0) target = $region9
    $region8: #{_dcca_forward_impl.1} parent=1 // pred_region
      _
    $region9: #{_dcca_forward_impl.1} parent=1 // pred_fallthru
      _
    // Predicated region
    $region10: #{_dcca_forward_impl.1} parent=1 // pred_check
      _
    $region11: #{_dcca_forward_impl.1} parent=1 // pred_check_branch
      %20 = sbr.rel (0) target = $region13
    $region12: #{_dcca_forward_impl.1} parent=1 // pred_region
      _
    $region13: #{_dcca_forward_impl.1} parent=1 // pred_fallthru
      _
    // Predicated region
    $region14: #{_dcca_forward_impl.1} parent=1 // pred_check
      _
    $region15: #{_dcca_forward_impl.1} parent=1 // pred_check_branch
      %22 = sbr.rel (0) target = $region17
    $region16: #{_dcca_forward_impl.1} parent=1 // pred_region
      _
    $region17: #{_dcca_forward_impl.1} parent=1 // pred_fallthru
      _
    // Predicated region
    $region18: #{_dcca_forward_impl.1} parent=1 // pred_check
      _
    $region19: #{_dcca_forward_impl.1} parent=1 // pred_check_branch
      %24 = sbr.rel (0) target = $region21
    $region20: #{_dcca_forward_impl.1} parent=1 // pred_region
      _
    $region21: #{_dcca_forward_impl.1} parent=1 // pred_fallthru
      _
    // Predicated region
    $region22: #{_dcca_forward_impl.1} parent=1 // pred_check
      _
    $region23: #{_dcca_forward_impl.1} parent=1 // pred_check_branch
      %26 = sbr.rel (0) target = $region25
    $region24: #{_dcca_forward_impl.1} parent=1 // pred_region
      _
    $region25: #{_dcca_forward_impl.1} parent=1 // pred_fallthru
      _
    %v27 = vld [vmem:[%s0] sm:$0xff]
    %v28 = vrot.slane %v27, 4
    %v29 = vadd.f32 %v27, %v28
    %v30 = vrot.slane %v29, 2
    %v31 = vadd.f32 %v29, %v30
    %v32 = vrot.slane %v31, 1
    %v33 = vadd.f32 %v31, %v32
    %v34 = vmul.f32 %v33, 0.125
    %v35 = vsub.f32 %v27, %v34
    %v36 = vmul.f32 %v35, %v35
    %v37 = vrot.slane %v36, 4
    %v38 = vadd.f32 %v36, %v37
    %v39 = vrot.slane %v38, 2
    %v40 = vadd.f32 %v38, %v39
    %v41 = vrot.slane %v40, 1
    %v42 = vadd.f32 %v40, %v41
    %v43 = vmul.f32 %v42, 0.125
    %v44 = vadd.f32 %v43, 1e-05
    %v45 = vrsqrt.pop %v44
    %v46 = vmul.f32 %v35, %v45
    %v47 = vld [vmem:[%s2] sm:$0x1]
    %v48 = vld [vmem:[%s2 + $0x1] sm:$0x1]
    %v49 = vlaneseq
    %v50 = vshrl.u32 %v49, 7
    %v51 = vsub.s32 0, %v50
    %v52 = vrot.slane %v47, %v51
    %v53 = vmul.f32 %v46, %v52
    %v54 = vlaneseq
    %v55 = vshrl.u32 %v54, 7
    %v56 = vsub.s32 0, %v55
    %v57 = vrot.slane %v48, %v56
    %v58 = vadd.f32 %v53, %v57
    %v59 = vmax.f32 %v58, 0.0
    %v60 = vld [vmem:[%s1] sm:$0xff]
    %v61 = vld [vmem:[%s1 + $0x8] sm:$0xff]
    %v62 = vld [vmem:[%s1 + $0x10] sm:$0xff]
    %v63 = vld [vmem:[%s1 + $0x18] sm:$0xff]
    %v64 = vld [vmem:[%s1 + $0x20] sm:$0xff]
    %v65 = vld [vmem:[%s1 + $0x28] sm:$0xff]
    %v66 = vld [vmem:[%s1 + $0x30] sm:$0xff]
    %v67 = vld [vmem:[%s1 + $0x38] sm:$0xff]
    %v68 = vld [vmem:[%s1 + $0x40] sm:$0xff]
    %v69 = vld [vmem:[%s1 + $0x48] sm:$0xff]
    %v70 = vld [vmem:[%s1 + $0x50] sm:$0xff]
    %v71 = vld [vmem:[%s1 + $0x58] sm:$0xff]
    %v72 = vld [vmem:[%s1 + $0x60] sm:$0xff]
    %v73 = vld [vmem:[%s1 + $0x68] sm:$0xff]
    %v74 = vld [vmem:[%s1 + $0x70] sm:$0xff]
    %v75 = vld [vmem:[%s1 + $0x78] sm:$0xff]
    %v76 = vld [vmem:[%s2 + $0x2] sm:$0x1]
    %v77 = vlaneseq
    %v78 = vshrl.u32 %v77, 7
    %v79 = vsub.s32 0, %v78
    %v80 = vrot.slane %v76, %v79
    %81 = vmatprep.subr.mxu0 0.0
    %82 = vmatpush1.msra.mxu0 %v60
    %83 = vmatprep.subr.mxu0 0.0
    %84 = vmatpush1.msra.mxu0 %v61
    %85 = vmatprep.subr.mxu0 0.0
    %86 = vmatpush1.msra.mxu0 %v62
    %87 = vmatprep.subr.mxu0 0.0
    %88 = vmatpush1.msra.mxu0 %v63
    %89 = vmatprep.subr.mxu0 0.0
    %90 = vmatpush1.msra.mxu0 %v64
    %91 = vmatprep.subr.mxu0 0.0
    %92 = vmatpush1.msra.mxu0 %v65
    %93 = vmatprep.subr.mxu0 0.0
    %94 = vmatpush1.msra.mxu0 %v66
    %95 = vmatprep.subr.mxu0 0.0
    %96 = vmatpush1.msra.mxu0 %v67
    %97 = vmatprep.subr.mxu0 0.0
    %98 = vmatpush1.msra.mxu0 %v68
    %99 = vmatprep.subr.mxu0 0.0
    %100 = vmatpush1.msra.mxu0 %v69
    %101 = vmatprep.subr.mxu0 0.0
    %102 = vmatpush1.msra.mxu0 %v70
    %103 = vmatprep.subr.mxu0 0.0
    %104 = vmatpush1.msra.mxu0 %v71
    %105 = vmatprep.subr.mxu0 0.0
    %106 = vmatpush1.msra.mxu0 %v72
    %107 = vmatprep.subr.mxu0 0.0
    %108 = vmatpush1.msra.mxu0 %v73
    %109 = vmatprep.subr.mxu0 0.0
    %110 = vmatpush1.msra.mxu0 %v74
    %111 = vmatprep.subr.mxu0 0.0
    %112 = vmatpush1.msra.mxu0 %v75
    %113 = vmatprep.subr.mxu0 0.0
    %114 = vmatpush1.msra.mxu0 0.0
    %115 = vmatprep.subr.mxu0 0.0
    %116 = vmatpush1.msra.mxu0 0.0
    %117 = vmatprep.subr.mxu0 0.0
    %118 = vmatpush1.msra.mxu0 0.0
    %119 = vmatprep.subr.mxu0 0.0
    %120 = vmatpush1.msra.mxu0 0.0
    %121 = vmatprep.subr.mxu0 0.0
    %122 = vmatpush1.msra.mxu0 0.0
    %123 = vmatprep.subr.mxu0 0.0
    %124 = vmatpush1.msra.mxu0 0.0
    %125 = vmatprep.subr.mxu0 0.0
    %126 = vmatpush1.msra.mxu0 0.0
    %127 = vmatprep.subr.mxu0 0.0
    %128 = vmatpush1.msra.mxu0 0.0
    %129 = vmatprep.subr.mxu0 0.0
    %130 = vmatpush1.msra.mxu0 0.0
    %131 = vmatprep.subr.mxu0 0.0
    %132 = vmatpush1.msra.mxu0 0.0
    %133 = vmatprep.subr.mxu0 0.0
    %134 = vmatpush1.msra.mxu0 0.0
    %135 = vmatprep.subr.mxu0 0.0
    %136 = vmatpush1.msra.mxu0 0.0
    %137 = vmatprep.subr.mxu0 0.0
    %138 = vmatpush1.msra.mxu0 0.0
    %139 = vmatprep.subr.mxu0 0.0
    %140 = vmatpush1.msra.mxu0 0.0
    %141 = vmatprep.subr.mxu0 0.0
    %142 = vmatpush1.msra.mxu0 0.0
    %143 = vmatprep.subr.mxu0 0.0
    %144 = vmatpush1.msra.mxu0 0.0
    %145 = vmatprep.mubr.f32.mxu0 0.0
    %146 = vmatmul.mubr.f32.gmra.mrb[0].mxu0 %v59
    %v147 = vpop.f32.mrb[0].mxu0
    %v148 = vadd.f32 %v80, %v147
    %v149 = vpop.f32.mrb[0].mxu0
    %150 = vdwg.mxu0
    %v151 = vrot.slane %v148, 4
    %v152 = vadd.f32 %v148, %v151
    %v153 = vrot.slane %v152, 2
    %v154 = vadd.f32 %v152, %v153
    %v155 = vrot.slane %v154, 1
    %v156 = vadd.f32 %v154, %v155
    %v157 = vmul.f32 %v156, 0.125
    %v158 = vsub.f32 %v148, %v157
    %v159 = vmul.f32 %v158, %v158
    %v160 = vrot.slane %v159, 4
    %v161 = vadd.f32 %v159, %v160
    %v162 = vrot.slane %v161, 2
    %v163 = vadd.f32 %v161, %v162
    %v164 = vrot.slane %v163, 1
    %v165 = vadd.f32 %v163, %v164
    %v166 = vmul.f32 %v165, 0.125
    %v167 = vadd.f32 %v166, 1e-05
    %v168 = vrsqrt.pop %v167
    %v169 = vmul.f32 %v158, %v168
    %v170 = vld [vmem:[%s2 + $0x3] sm:$0x1]
    %v171 = vld [vmem:[%s2 + $0x4] sm:$0x1]
    %v172 = vlaneseq
    %v173 = vshrl.u32 %v172, 7
    %v174 = vsub.s32 0, %v173
    %v175 = vrot.slane %v170, %v174
    %v176 = vmul.f32 %v169, %v175
    %v177 = vlaneseq
    %v178 = vshrl.u32 %v177, 7
    %v179 = vsub.s32 0, %v178
    %v180 = vrot.slane %v171, %v179
    %v181 = vadd.f32 %v176, %v180
    %v182 = vld [vmem:[%s1 + $0x80] sm:$0xff]
    %v183 = vld [vmem:[%s1 + $0x88] sm:$0xff]
    %v184 = vld [vmem:[%s1 + $0x90] sm:$0xff]
    %v185 = vld [vmem:[%s1 + $0x98] sm:$0xff]
    %v186 = vld [vmem:[%s1 + $0xa0] sm:$0xff]
    %v187 = vld [vmem:[%s1 + $0xa8] sm:$0xff]
    %v188 = vld [vmem:[%s1 + $0xb0] sm:$0xff]
    %v189 = vld [vmem:[%s1 + $0xb8] sm:$0xff]
    %v190 = vld [vmem:[%s1 + $0xc0] sm:$0xff]
    %v191 = vld [vmem:[%s1 + $0xc8] sm:$0xff]
    %v192 = vld [vmem:[%s1 + $0xd0] sm:$0xff]
    %v193 = vld [vmem:[%s1 + $0xd8] sm:$0xff]
    %v194 = vld [vmem:[%s1 + $0xe0] sm:$0xff]
    %v195 = vld [vmem:[%s1 + $0xe8] sm:$0xff]
    %v196 = vld [vmem:[%s1 + $0xf0] sm:$0xff]
    %v197 = vld [vmem:[%s1 + $0xf8] sm:$0xff]
    %v198 = vld [vmem:[%s2 + $0x5] sm:$0x1]
    %v199 = vlaneseq
    %v200 = vshrl.u32 %v199, 7
    %v201 = vsub.s32 0, %v200
    %v202 = vrot.slane %v198, %v201
    %203 = vmatprep.subr.mxu0 0.0
    %204 = vmatpush1.msra.mxu0 %v182
    %205 = vmatprep.subr.mxu0 0.0
    %206 = vmatpush1.msra.mxu0 %v183
    %207 = vmatprep.subr.mxu0 0.0
    %208 = vmatpush1.msra.mxu0 %v184
    %209 = vmatprep.subr.mxu0 0.0
    %210 = vmatpush1.msra.mxu0 %v185
    %211 = vmatprep.subr.mxu0 0.0
    %212 = vmatpush1.msra.mxu0 %v186
    %213 = vmatprep.subr.mxu0 0.0
    %214 = vmatpush1.msra.mxu0 %v187
    %215 = vmatprep.subr.mxu0 0.0
    %216 = vmatpush1.msra.mxu0 %v188
    %217 = vmatprep.subr.mxu0 0.0
    %218 = vmatpush1.msra.mxu0 %v189
    %219 = vmatprep.subr.mxu0 0.0
    %220 = vmatpush1.msra.mxu0 %v190
    %221 = vmatprep.subr.mxu0 0.0
    %222 = vmatpush1.msra.mxu0 %v191
    %223 = vmatprep.subr.mxu0 0.0
    %224 = vmatpush1.msra.mxu0 %v192
    %225 = vmatprep.subr.mxu0 0.0
    %226 = vmatpush1.msra.mxu0 %v193
    %227 = vmatprep.subr.mxu0 0.0
    %228 = vmatpush1.msra.mxu0 %v194
    %229 = vmatprep.subr.mxu0 0.0
    %230 = vmatpush1.msra.mxu0 %v195
    %231 = vmatprep.subr.mxu0 0.0
    %232 = vmatpush1.msra.mxu0 %v196
    %233 = vmatprep.subr.mxu0 0.0
    %234 = vmatpush1.msra.mxu0 %v197
    %235 = vmatprep.subr.mxu0 0.0
    %236 = vmatpush1.msra.mxu0 0.0
    %237 = vmatprep.subr.mxu0 0.0
    %238 = vmatpush1.msra.mxu0 0.0
    %239 = vmatprep.subr.mxu0 0.0
    %240 = vmatpush1.msra.mxu0 0.0
    %241 = vmatprep.subr.mxu0 0.0
    %242 = vmatpush1.msra.mxu0 0.0
    %243 = vmatprep.subr.mxu0 0.0
    %244 = vmatpush1.msra.mxu0 0.0
    %245 = vmatprep.subr.mxu0 0.0
    %246 = vmatpush1.msra.mxu0 0.0
    %247 = vmatprep.subr.mxu0 0.0
    %248 = vmatpush1.msra.mxu0 0.0
    %249 = vmatprep.subr.mxu0 0.0
    %250 = vmatpush1.msra.mxu0 0.0
    %251 = vmatprep.subr.mxu0 0.0
    %252 = vmatpush1.msra.mxu0 0.0
    %253 = vmatprep.subr.mxu0 0.0
    %254 = vmatpush1.msra.mxu0 0.0
    %255 = vmatprep.subr.mxu0 0.0
    %256 = vmatpush1.msra.mxu0 0.0
    %257 = vmatprep.subr.mxu0 0.0
    %258 = vmatpush1.msra.mxu0 0.0
    %259 = vmatprep.subr.mxu0 0.0
    %260 = vmatpush1.msra.mxu0 0.0
    %261 = vmatprep.subr.mxu0 0.0
    %262 = vmatpush1.msra.mxu0 0.0
    %263 = vmatprep.subr.mxu0 0.0
    %264 = vmatpush1.msra.mxu0 0.0
    %265 = vmatprep.subr.mxu0 0.0
    %266 = vmatpush1.msra.mxu0 0.0
    %267 = vmatprep.mubr.f32.mxu0 0.0
    %268 = vmatmul.mubr.f32.gmra.mrb[0].mxu0 %v181
    %v269 = vpop.f32.mrb[0].mxu0
    %v270 = vadd.f32 %v202, %v269
    %v271 = vpop.f32.mrb[0].mxu0
    %272 = vdwg.mxu0
    %273 = vst [vmem:[#allocation2] sm:$0xff] %v270
    %v274 = vld [vmem:[%s3] sm:$0xff]
    %v275 = vrot.slane %v274, 4
    %v276 = vadd.f32 %v274, %v275
    %v277 = vrot.slane %v276, 2
    %v278 = vadd.f32 %v276, %v277
    %v279 = vrot.slane %v278, 1
    %v280 = vadd.f32 %v278, %v279
    %v281 = vmul.f32 %v280, 0.125
    %v282 = vsub.f32 %v274, %v281
    %v283 = vmul.f32 %v282, %v282
    %v284 = vrot.slane %v283, 4
    %v285 = vadd.f32 %v283, %v284
    %v286 = vrot.slane %v285, 2
    %v287 = vadd.f32 %v285, %v286
    %v288 = vrot.slane %v287, 1
    %v289 = vadd.f32 %v287, %v288
    %v290 = vmul.f32 %v289, 0.125
    %v291 = vadd.f32 %v290, 1e-05
    %v292 = vrsqrt.pop %v291
    %v293 = vmul.f32 %v282, %v292
    %v294 = vld [vmem:[%s5] sm:$0x1]
    %v295 = vld [vmem:[%s5 + $0x1] sm:$0x1]
    %v296 = vlaneseq
    %v297 = vshrl.u32 %v296, 7
    %v298 = vsub.s32 0, %v297
    %v299 = vrot.slane %v294, %v298
    %v300 = vmul.f32 %v293, %v299
    %v301 = vlaneseq
    %v302 = vshrl.u32 %v301, 7
    %v303 = vsub.s32 0, %v302
    %v304 = vrot.slane %v295, %v303
    %v305 = vadd.f32 %v300, %v304
    %v306 = vmax.f32 %v305, 0.0
    %v307 = vld [vmem:[%s4] sm:$0xff]
    %v308 = vld [vmem:[%s4 + $0x8] sm:$0xff]
    %v309 = vld [vmem:[%s4 + $0x10] sm:$0xff]
    %v310 = vld [vmem:[%s4 + $0x18] sm:$0xff]
    %v311 = vld [vmem:[%s4 + $0x20] sm:$0xff]
    %v312 = vld [vmem:[%s4 + $0x28] sm:$0xff]
    %v313 = vld [vmem:[%s4 + $0x30] sm:$0xff]
    %v314 = vld [vmem:[%s4 + $0x38] sm:$0xff]
    %v315 = vld [vmem:[%s4 + $0x40] sm:$0xff]
    %v316 = vld [vmem:[%s4 + $0x48] sm:$0xff]
    %v317 = vld [vmem:[%s4 + $0x50] sm:$0xff]
    %v318 = vld [vmem:[%s4 + $0x58] sm:$0xff]
    %v319 = vld [vmem:[%s4 + $0x60] sm:$0xff]
    %v320 = vld [vmem:[%s4 + $0x68] sm:$0xff]
    %v321 = vld [vmem:[%s4 + $0x70] sm:$0xff]
    %v322 = vld [vmem:[%s4 + $0x78] sm:$0xff]
    %v323 = vld [vmem:[%s5 + $0x2] sm:$0x1]
    %v324 = vlaneseq
    %v325 = vshrl.u32 %v324, 7
    %v326 = vsub.s32 0, %v325
    %v327 = vrot.slane %v323, %v326
    %328 = vmatprep.subr.mxu0 0.0
    %329 = vmatpush1.msra.mxu0 %v307
    %330 = vmatprep.subr.mxu0 0.0
    %331 = vmatpush1.msra.mxu0 %v308
    %332 = vmatprep.subr.mxu0 0.0
    %333 = vmatpush1.msra.mxu0 %v309
    %334 = vmatprep.subr.mxu0 0.0
    %335 = vmatpush1.msra.mxu0 %v310
    %336 = vmatprep.subr.mxu0 0.0
    %337 = vmatpush1.msra.mxu0 %v311
    %338 = vmatprep.subr.mxu0 0.0
    %339 = vmatpush1.msra.mxu0 %v312
    %340 = vmatprep.subr.mxu0 0.0
    %341 = vmatpush1.msra.mxu0 %v313
    %342 = vmatprep.subr.mxu0 0.0
    %343 = vmatpush1.msra.mxu0 %v314
    %344 = vmatprep.subr.mxu0 0.0
    %345 = vmatpush1.msra.mxu0 %v315
    %346 = vmatprep.subr.mxu0 0.0
    %347 = vmatpush1.msra.mxu0 %v316
    %348 = vmatprep.subr.mxu0 0.0
    %349 = vmatpush1.msra.mxu0 %v317
    %350 = vmatprep.subr.mxu0 0.0
    %351 = vmatpush1.msra.mxu0 %v318
    %352 = vmatprep.subr.mxu0 0.0
    %353 = vmatpush1.msra.mxu0 %v319
    %354 = vmatprep.subr.mxu0 0.0
    %355 = vmatpush1.msra.mxu0 %v320
    %356 = vmatprep.subr.mxu0 0.0
    %357 = vmatpush1.msra.mxu0 %v321
    %358 = vmatprep.subr.mxu0 0.0
    %359 = vmatpush1.msra.mxu0 %v322
    %360 = vmatprep.subr.mxu0 0.0
    %361 = vmatpush1.msra.mxu0 0.0
    %362 = vmatprep.subr.mxu0 0.0
    %363 = vmatpush1.msra.mxu0 0.0
    %364 = vmatprep.subr.mxu0 0.0
    %365 = vmatpush1.msra.mxu0 0.0
    %366 = vmatprep.subr.mxu0 0.0
    %367 = vmatpush1.msra.mxu0 0.0
    %368 = vmatprep.subr.mxu0 0.0
    %369 = vmatpush1.msra.mxu0 0.0
    %370 = vmatprep.subr.mxu0 0.0
    %371 = vmatpush1.msra.mxu0 0.0
    %372 = vmatprep.subr.mxu0 0.0
    %373 = vmatpush1.msra.mxu0 0.0
    %374 = vmatprep.subr.mxu0 0.0
    %375 = vmatpush1.msra.mxu0 0.0
    %376 = vmatprep.subr.mxu0 0.0
    %377 = vmatpush1.msra.mxu0 0.0
    %378 = vmatprep.subr.mxu0 0.0
    %379 = vmatpush1.msra.mxu0 0.0
    %380 = vmatprep.subr.mxu0 0.0
    %381 = vmatpush1.msra.mxu0 0.0
    %382 = vmatprep.subr.mxu0 0.0
    %383 = vmatpush1.msra.mxu0 0.0
    %384 = vmatprep.subr.mxu0 0.0
    %385 = vmatpush1.msra.mxu0 0.0
    %386 = vmatprep.subr.mxu0 0.0
    %387 = vmatpush1.msra.mxu0 0.0
    %388 = vmatprep.subr.mxu0 0.0
    %389 = vmatpush1.msra.mxu0 0.0
    %390 = vmatprep.subr.mxu0 0.0
    %391 = vmatpush1.msra.mxu0 0.0
    %392 = vmatprep.mubr.f32.mxu0 0.0
    %393 = vmatmul.mubr.f32.gmra.mrb[0].mxu0 %v306
    %v394 = vpop.f32.mrb[0].mxu0
    %v395 = vadd.f32 %v327, %v394
    %v396 = vpop.f32.mrb[0].mxu0
    %397 = vdwg.mxu0
    %v398 = vrot.slane %v395, 4
    %v399 = vadd.f32 %v395, %v398
    %v400 = vrot.slane %v399, 2
    %v401 = vadd.f32 %v399, %v400
    %v402 = vrot.slane %v401, 1
    %v403 = vadd.f32 %v401, %v402
    %v404 = vmul.f32 %v403, 0.125
    %v405 = vsub.f32 %v395, %v404
    %v406 = vmul.f32 %v405, %v405
    %v407 = vrot.slane %v406, 4
    %v408 = vadd.f32 %v406, %v407
    %v409 = vrot.slane %v408, 2
    %v410 = vadd.f32 %v408, %v409
    %v411 = vrot.slane %v410, 1
    %v412 = vadd.f32 %v410, %v411
    %v413 = vmul.f32 %v412, 0.125
    %v414 = vadd.f32 %v413, 1e-05
    %v415 = vrsqrt.pop %v414
    %v416 = vmul.f32 %v405, %v415
    %v417 = vld [vmem:[%s5 + $0x3] sm:$0x1]
    %v418 = vld [vmem:[%s5 + $0x4] sm:$0x1]
    %v419 = vlaneseq
    %v420 = vshrl.u32 %v419, 7
    %v421 = vsub.s32 0, %v420
    %v422 = vrot.slane %v417, %v421
    %v423 = vmul.f32 %v416, %v422
    %v424 = vlaneseq
    %v425 = vshrl.u32 %v424, 7
    %v426 = vsub.s32 0, %v425
    %v427 = vrot.slane %v418, %v426
    %v428 = vadd.f32 %v423, %v427
    %v429 = vld [vmem:[%s4 + $0x80] sm:$0xff]
    %v430 = vld [vmem:[%s4 + $0x88] sm:$0xff]
    %v431 = vld [vmem:[%s4 + $0x90] sm:$0xff]
    %v432 = vld [vmem:[%s4 + $0x98] sm:$0xff]
    %v433 = vld [vmem:[%s4 + $0xa0] sm:$0xff]
    %v434 = vld [vmem:[%s4 + $0xa8] sm:$0xff]
    %v435 = vld [vmem:[%s4 + $0xb0] sm:$0xff]
    %v436 = vld [vmem:[%s4 + $0xb8] sm:$0xff]
    %v437 = vld [vmem:[%s4 + $0xc0] sm:$0xff]
    %v438 = vld [vmem:[%s4 + $0xc8] sm:$0xff]
    %v439 = vld [vmem:[%s4 + $0xd0] sm:$0xff]
    %v440 = vld [vmem:[%s4 + $0xd8] sm:$0xff]
    %v441 = vld [vmem:[%s4 + $0xe0] sm:$0xff]
    %v442 = vld [vmem:[%s4 + $0xe8] sm:$0xff]
    %v443 = vld [vmem:[%s4 + $0xf0] sm:$0xff]
    %v444 = vld [vmem:[%s4 + $0xf8] sm:$0xff]
    %v445 = vld [vmem:[%s5 + $0x5] sm:$0x1]
    %v446 = vlaneseq
    %v447 = vshrl.u32 %v446, 7
    %v448 = vsub.s32 0, %v447
    %v449 = vrot.slane %v445, %v448
    %450 = vmatprep.subr.mxu0 0.0
    %451 = vmatpush1.msra.mxu0 %v429
    %452 = vmatprep.subr.mxu0 0.0
    %453 = vmatpush1.msra.mxu0 %v430
    %454 = vmatprep.subr.mxu0 0.0
    %455 = vmatpush1.msra.mxu0 %v431
    %456 = vmatprep.subr.mxu0 0.0
    %457 = vmatpush1.msra.mxu0 %v432
    %458 = vmatprep.subr.mxu0 0.0
    %459 = vmatpush1.msra.mxu0 %v433
    %460 = vmatprep.subr.mxu0 0.0
    %461 = vmatpush1.msra.mxu0 %v434
    %462 = vmatprep.subr.mxu0 0.0
    %463 = vmatpush1.msra.mxu0 %v435
    %464 = vmatprep.subr.mxu0 0.0
    %465 = vmatpush1.msra.mxu0 %v436
    %466 = vmatprep.subr.mxu0 0.0
    %467 = vmatpush1.msra.mxu0 %v437
    %468 = vmatprep.subr.mxu0 0.0
    %469 = vmatpush1.msra.mxu0 %v438
    %470 = vmatprep.subr.mxu0 0.0
    %471 = vmatpush1.msra.mxu0 %v439
    %472 = vmatprep.subr.mxu0 0.0
    %473 = vmatpush1.msra.mxu0 %v440
    %474 = vmatprep.subr.mxu0 0.0
    %475 = vmatpush1.msra.mxu0 %v441
    %476 = vmatprep.subr.mxu0 0.0
    %477 = vmatpush1.msra.mxu0 %v442
    %478 = vmatprep.subr.mxu0 0.0
    %479 = vmatpush1.msra.mxu0 %v443
    %480 = vmatprep.subr.mxu0 0.0
    %481 = vmatpush1.msra.mxu0 %v444
    %482 = vmatprep.subr.mxu0 0.0
    %483 = vmatpush1.msra.mxu0 0.0
    %484 = vmatprep.subr.mxu0 0.0
    %485 = vmatpush1.msra.mxu0 0.0
    %486 = vmatprep.subr.mxu0 0.0
    %487 = vmatpush1.msra.mxu0 0.0
    %488 = vmatprep.subr.mxu0 0.0
    %489 = vmatpush1.msra.mxu0 0.0
    %490 = vmatprep.subr.mxu0 0.0
    %491 = vmatpush1.msra.mxu0 0.0
    %492 = vmatprep.subr.mxu0 0.0
    %493 = vmatpush1.msra.mxu0 0.0
    %494 = vmatprep.subr.mxu0 0.0
    %495 = vmatpush1.msra.mxu0 0.0
    %496 = vmatprep.subr.mxu0 0.0
    %497 = vmatpush1.msra.mxu0 0.0
    %498 = vmatprep.subr.mxu0 0.0
    %499 = vmatpush1.msra.mxu0 0.0
    %500 = vmatprep.subr.mxu0 0.0
    %501 = vmatpush1.msra.mxu0 0.0
    %502 = vmatprep.subr.mxu0 0.0
    %503 = vmatpush1.msra.mxu0 0.0
    %504 = vmatprep.subr.mxu0 0.0
    %505 = vmatpush1.msra.mxu0 0.0
    %506 = vmatprep.subr.mxu0 0.0
    %507 = vmatpush1.msra.mxu0 0.0
    %508 = vmatprep.subr.mxu0 0.0
    %509 = vmatpush1.msra.mxu0 0.0
    %510 = vmatprep.subr.mxu0 0.0
    %511 = vmatpush1.msra.mxu0 0.0
    %512 = vmatprep.subr.mxu0 0.0
    %513 = vmatpush1.msra.mxu0 0.0
    %514 = vmatprep.mubr.f32.mxu0 0.0
    %515 = vmatmul.mubr.f32.gmra.mrb[0].mxu0 %v428
    %v516 = vpop.f32.mrb[0].mxu0
    %v517 = vadd.f32 %v449, %v516
    %v518 = vpop.f32.mrb[0].mxu0
    %519 = vdwg.mxu0
    %520 = vst [vmem:[#allocation4] sm:$0xff] %v517
    // Predicated region
    $region26: #{_dcca_forward_impl.1} parent=1 // pred_check
      _
    $region27: #{_dcca_forward_impl.1} parent=1 // pred_check_branch
      %522 = sbr.rel (0) target = $region29
    $region28: #{_dcca_forward_impl.1} parent=1 // pred_region
      %s524 = ssub.s32 128, 128
      %525 = vsyncadd [#allocation3], %s524
      %s527 = sshll.u32 [#allocation2], 4
      %s528 = int_to_ptr.vmem [resolvable:$true] %s527
      %530 = dma.vmem_to_hbm [thread:$0]  %s528, 128, %s6, [#allocation3]
    $region29: #{_dcca_forward_impl.1} parent=1 // pred_fallthru
      _
    // Predicated region
    $region30: #{_dcca_forward_impl.1} parent=1 // pred_check
      _
    $region31: #{_dcca_forward_impl.1} parent=1 // pred_check_branch
      %532 = sbr.rel (0) target = $region33
    $region32: #{_dcca_forward_impl.1} parent=1 // pred_region
      %s534 = ssub.s32 128, 128
      %535 = vsyncadd [#allocation5], %s534
      %s537 = sshll.u32 [#allocation4], 4
      %s538 = int_to_ptr.vmem [resolvable:$true] %s537
      %540 = dma.vmem_to_hbm [thread:$0]  %s538, 128, %s7, [#allocation5]
    $region33: #{_dcca_forward_impl.1} parent=1 // pred_fallthru
      _
    // Predicated region
    $region34: #{_dcca_forward_impl.1} parent=1 // pred_check
      _
    $region35: #{_dcca_forward_impl.1} parent=1 // pred_check_branch
      %542 = sbr.rel (0) target = $region37
    $region36: #{_dcca_forward_impl.1} parent=1 // pred_region
      %543 = dma.done [#allocation3], 128
    $region37: #{_dcca_forward_impl.1} parent=1 // pred_fallthru
      _
    // Predicated region
    $region38: #{_dcca_forward_impl.1} parent=1 // pred_check
      _
    $region39: #{_dcca_forward_impl.1} parent=1 // pred_check_branch
      %545 = sbr.rel (0) target = $region41
    $region40: #{_dcca_forward_impl.1} parent=1 // pred_region
      %546 = dma.done [#allocation5], 128
    $region41: #{_dcca_forward_impl.1} parent=1 // pred_fallthru
      _
    %547 = vsyncpa [#allocation3], 1
    %548 = vsyncpa [#allocation5], 1

</llo_original>
